<compile_context>
chip_gen: v7x
topology: tpu7x:2x2x1
jax: 0.10.0
libtpu: 0.0.40
codegen_flags: <defaults>
</compile_context>

<pallas_src>
import jax
import jax.numpy as jnp
from jax.experimental import pallas as pl
from jax.experimental.pallas import tpu as pltpu


def _convt1x1_sigmoid_kernel(x_ref, wt_ref, b_ref, o_ref):
    # x_ref: (BT, Cin, WT)   wt_ref: (Cout, Cin)   b_ref: (Cout, 1)
    # o_ref: (BT, Cout, WT)
    wt = wt_ref[...]       # resident 16x16 weight (already transposed: [co, ci])
    bias = b_ref[...]      # (Cout, 1) -> broadcasts across lanes
    bt = x_ref.shape[0]
    for b in range(bt):    # static unroll; each iter: (16,16)x(16,WT) MXU matmul
        y = jnp.dot(wt, x_ref[b], preferred_element_type=jnp.float32)
        o_ref[b] = jax.nn.sigmoid(y + bias).astype(o_ref.dtype)


def _pick_tiles(nh, w):
    # Lane-dense W tile: full W when it fits, else a multiple-of-128 tile with
    # a masked tail block.  Row tile amortizes per-step overhead further.
    w_tile = w if w <= 4096 else 4096
    b_tile = min(nh, 8)
    return b_tile, w_tile


def model_forward(x1, weight, bias):
    """x1: (N, H, C=16, W) f32; weight: (Cin, Cout, 1, 1); bias: (Cout,)."""
    N, H, C, W = x1.shape
    Cin, Cout = weight.shape[0], weight.shape[1]
    assert C == Cin, "dim 2 of the input must equal the conv in_channels"

    NH = N * H
    x3 = x1.reshape(NH, C, W)                  # free reshape (no HBM transpose pass)
    w_t = jnp.transpose(weight[:, :, 0, 0])    # (Cout, Cin) — 16x16, trivial
    b2 = bias.reshape(Cout, 1)

    BT, WT = _pick_tiles(NH, W)
    grid = (pl.cdiv(NH, BT), pl.cdiv(W, WT))

    cost = pl.CostEstimate(
        flops=2 * NH * Cin * Cout * W + NH * Cout * W,
        transcendentals=NH * Cout * W,
        bytes_accessed=4 * (NH * Cin * W + NH * Cout * W + Cin * Cout + Cout),
    )

    out3 = pl.pallas_call(
        _convt1x1_sigmoid_kernel,
        out_shape=jax.ShapeDtypeStruct((NH, Cout, W), x1.dtype),
        grid=grid,
        in_specs=[
            pl.BlockSpec((BT, Cin, WT), lambda i, j: (i, 0, j)),
            pl.BlockSpec((Cout, Cin), lambda i, j: (0, 0)),
            pl.BlockSpec((Cout, 1), lambda i, j: (0, 0)),
        ],
        out_specs=pl.BlockSpec((BT, Cout, WT), lambda i, j: (i, 0, j)),
        compiler_params=pltpu.CompilerParams(
            dimension_semantics=("parallel", "parallel")),
        cost_estimate=cost,
    )(x3, w_t, b2)

    return out3.reshape(N, H, Cout, W)         # free reshape back to (N,H,C,W)


def _reference(x1, weight, bias):
    # pure-JAX reference of the same math
    wmat = weight[:, :, 0, 0]                                   # (Cin, Cout)
    y = jnp.einsum("nhcw,co->nhow", x1, wmat) + bias[None, None, :, None]
    return jax.nn.sigmoid(y)


if __name__ == "__main__":
    key = jax.random.PRNGKey(0)
    k_x, k_w, k_b = jax.random.split(key, 3)

    # small shapes consistent with the module: dim-2 must equal 16 (conv channels)
    N, H, C, W = 2, 8, 16, 32
    x1 = jax.random.normal(k_x, (N, H, C, W), dtype=jnp.float32)

    # ConvTranspose2d(16, 16, kernel_size=1): weight (Cin, Cout, 1, 1), bias (Cout,)
    bound = 1.0 / (float(C) ** 0.5)
    weight = jax.random.uniform(k_w, (C, C, 1, 1), jnp.float32, -bound, bound)
    bias = jax.random.uniform(k_b, (C,), jnp.float32, -bound, bound)

    out = jax.block_until_ready(model_forward(x1, weight, bias))
    ref = _reference(x1, weight, bias)
    assert out.shape == (N, H, C, W)
    assert jnp.allclose(out, ref, atol=1e-5, rtol=1e-5)

    # uneven shapes: N*H=11 is not a multiple of the 8-row tile -> masked tail block
    x1b = jax.random.normal(k_x, (1, 11, 16, 24), dtype=jnp.float32)
    outb = jax.block_until_ready(model_forward(x1b, weight, bias))
    refb = _reference(x1b, weight, bias)
    assert outb.shape == x1b.shape
    assert jnp.allclose(outb, refb, atol=1e-5, rtol=1e-5)

    print("KERNEL_OK")
</pallas_src>

<mosaic_0001>
module attributes {stable_mosaic.version = 11 : i64} {
  func.func @_convt1x1_sigmoid_kernel(%arg0: i32, %arg1: i32, %arg2: memref<8x16x32xf32, #tpu.memory_space<vmem>>, %arg3: memref<16x16xf32, #tpu.memory_space<vmem>>, %arg4: memref<16x1xf32, #tpu.memory_space<vmem>>, %arg5: memref<8x16x32xf32, #tpu.memory_space<vmem>>) attributes {dimension_semantics = [#tpu.dimension_semantics<parallel>, #tpu.dimension_semantics<parallel>], iteration_bounds = array<i64: 2, 1>, scalar_prefetch = 0 : i64, scratch_operands = 0 : i64, tpu.core_type = #tpu.core_type<tc>, window_params = [{transform_indices = @transform_0, window_bounds = array<i64: 8, 16, 32>}, {pipeline_mode = #tpu.pipeline_mode<synchronous>, transform_indices = @transform_1, window_bounds = array<i64: 16, 16>}, {pipeline_mode = #tpu.pipeline_mode<synchronous>, transform_indices = @transform_2, window_bounds = array<i64: 16, 1>}, {transform_indices = @transform_3, window_bounds = array<i64: 8, 16, 32>}]} {
    %c0 = arith.constant 0 : index
    %c0_0 = arith.constant 0 : index
    %0 = vector.load %arg3[%c0, %c0_0] : memref<16x16xf32, #tpu.memory_space<vmem>>, vector<16x16xf32>
    %c0_1 = arith.constant 0 : index
    %c0_2 = arith.constant 0 : index
    %1 = vector.load %arg4[%c0_1, %c0_2] : memref<16x1xf32, #tpu.memory_space<vmem>>, vector<16x1xf32>
    %c0_3 = arith.constant 0 : index
    %c0_4 = arith.constant 0 : index
    %c0_5 = arith.constant 0 : index
    %2 = vector.load %arg2[%c0_3, %c0_4, %c0_5] : memref<8x16x32xf32, #tpu.memory_space<vmem>>, vector<1x16x32xf32>
    %3 = vector.shape_cast %2 : vector<1x16x32xf32> to vector<16x32xf32>
    %cst = arith.constant dense<0.000000e+00> : vector<16x32xf32>
    %4 = tpu.matmul %0, %3, %cst {dimension_numbers = #tpu.dot_dimension_numbers<[1], [0], [0], [1], [0, 0, 1, 1], [], []>} : vector<16x16xf32>, vector<16x32xf32>, vector<16x32xf32> -> vector<16x32xf32>
    %5 = vector.broadcast %1 : vector<16x1xf32> to vector<16x32xf32>
    %6 = arith.addf %4, %5 : vector<16x32xf32>
    %7 = arith.negf %6 : vector<16x32xf32>
    %8 = math.exp %7 : vector<16x32xf32>
    %cst_6 = arith.constant 1.000000e+00 : f32
    %9 = vector.broadcast %cst_6 : f32 to vector<16x32xf32>
    %10 = arith.addf %9, %8 : vector<16x32xf32>
    %11 = arith.divf %9, %10 : vector<16x32xf32>
    %c0_7 = arith.constant 0 : index
    %c0_8 = arith.constant 0 : index
    %c0_9 = arith.constant 0 : index
    %12 = vector.load %arg5[%c0_7, %c0_8, %c0_9] : memref<8x16x32xf32, #tpu.memory_space<vmem>>, vector<1x16x32xf32>
    %13 = vector.shape_cast %12 : vector<1x16x32xf32> to vector<16x32xf32>
    %14 = vector.shape_cast %11 : vector<16x32xf32> to vector<1x16x32xf32>
    tpu.vector_store %arg5[%c0_7, %c0_8, %c0_9], %14 {strides = array<i32>} : memref<8x16x32xf32, #tpu.memory_space<vmem>>, vector<1x16x32xf32>,
    %c1 = arith.constant 1 : index
    %c0_10 = arith.constant 0 : index
    %c0_11 = arith.constant 0 : index
    %15 = vector.load %arg2[%c1, %c0_10, %c0_11] : memref<8x16x32xf32, #tpu.memory_space<vmem>>, vector<1x16x32xf32>
    %16 = vector.shape_cast %15 : vector<1x16x32xf32> to vector<16x32xf32>
    %cst_12 = arith.constant dense<0.000000e+00> : vector<16x32xf32>
    %17 = tpu.matmul %0, %16, %cst_12 {dimension_numbers = #tpu.dot_dimension_numbers<[1], [0], [0], [1], [0, 0, 1, 1], [], []>} : vector<16x16xf32>, vector<16x32xf32>, vector<16x32xf32> -> vector<16x32xf32>
    %18 = vector.broadcast %1 : vector<16x1xf32> to vector<16x32xf32>
    %19 = arith.addf %17, %18 : vector<16x32xf32>
    %20 = arith.negf %19 : vector<16x32xf32>
    %21 = math.exp %20 : vector<16x32xf32>
    %cst_13 = arith.constant 1.000000e+00 : f32
    %22 = vector.broadcast %cst_13 : f32 to vector<16x32xf32>
    %23 = arith.addf %22, %21 : vector<16x32xf32>
    %24 = arith.divf %22, %23 : vector<16x32xf32>
    %c1_14 = arith.constant 1 : index
    %c0_15 = arith.constant 0 : index
    %c0_16 = arith.constant 0 : index
    %25 = vector.load %arg5[%c1_14, %c0_15, %c0_16] : memref<8x16x32xf32, #tpu.memory_space<vmem>>, vector<1x16x32xf32>
    %26 = vector.shape_cast %25 : vector<1x16x32xf32> to vector<16x32xf32>
    %27 = vector.shape_cast %24 : vector<16x32xf32> to vector<1x16x32xf32>
    tpu.vector_store %arg5[%c1_14, %c0_15, %c0_16], %27 {strides = array<i32>} : memref<8x16x32xf32, #tpu.memory_space<vmem>>, vector<1x16x32xf32>,
    %c2 = arith.constant 2 : index
    %c0_17 = arith.constant 0 : index
    %c0_18 = arith.constant 0 : index
    %28 = vector.load %arg2[%c2, %c0_17, %c0_18] : memref<8x16x32xf32, #tpu.memory_space<vmem>>, vector<1x16x32xf32>
    %29 = vector.shape_cast %28 : vector<1x16x32xf32> to vector<16x32xf32>
    %cst_19 = arith.constant dense<0.000000e+00> : vector<16x32xf32>
    %30 = tpu.matmul %0, %29, %cst_19 {dimension_numbers = #tpu.dot_dimension_numbers<[1], [0], [0], [1], [0, 0, 1, 1], [], []>} : vector<16x16xf32>, vector<16x32xf32>, vector<16x32xf32> -> vector<16x32xf32>
    %31 = vector.broadcast %1 : vector<16x1xf32> to vector<16x32xf32>
    %32 = arith.addf %30, %31 : vector<16x32xf32>
    %33 = arith.negf %32 : vector<16x32xf32>
    %34 = math.exp %33 : vector<16x32xf32>
    %cst_20 = arith.constant 1.000000e+00 : f32
    %35 = vector.broadcast %cst_20 : f32 to vector<16x32xf32>
    %36 = arith.addf %35, %34 : vector<16x32xf32>
    %37 = arith.divf %35, %36 : vector<16x32xf32>
    %c2_21 = arith.constant 2 : index
    %c0_22 = arith.constant 0 : index
    %c0_23 = arith.constant 0 : index
    %38 = vector.load %arg5[%c2_21, %c0_22, %c0_23] : memref<8x16x32xf32, #tpu.memory_space<vmem>>, vector<1x16x32xf32>
    %39 = vector.shape_cast %38 : vector<1x16x32xf32> to vector<16x32xf32>
    %40 = vector.shape_cast %37 : vector<16x32xf32> to vector<1x16x32xf32>
    tpu.vector_store %arg5[%c2_21, %c0_22, %c0_23], %40 {strides = array<i32>} : memref<8x16x32xf32, #tpu.memory_space<vmem>>, vector<1x16x32xf32>,
    %c3 = arith.constant 3 : index
    %c0_24 = arith.constant 0 : index
    %c0_25 = arith.constant 0 : index
    %41 = vector.load %arg2[%c3, %c0_24, %c0_25] : memref<8x16x32xf32, #tpu.memory_space<vmem>>, vector<1x16x32xf32>
    %42 = vector.shape_cast %41 : vector<1x16x32xf32> to vector<16x32xf32>
    %cst_26 = arith.constant dense<0.000000e+00> : vector<16x32xf32>
    %43 = tpu.matmul %0, %42, %cst_26 {dimension_numbers = #tpu.dot_dimension_numbers<[1], [0], [0], [1], [0, 0, 1, 1], [], []>} : vector<16x16xf32>, vector<16x32xf32>, vector<16x32xf32> -> vector<16x32xf32>
    %44 = vector.broadcast %1 : vector<16x1xf32> to vector<16x32xf32>
    %45 = arith.addf %43, %44 : vector<16x32xf32>
    %46 = arith.negf %45 : vector<16x32xf32>
    %47 = math.exp %46 : vector<16x32xf32>
    %cst_27 = arith.constant 1.000000e+00 : f32
    %48 = vector.broadcast %cst_27 : f32 to vector<16x32xf32>
    %49 = arith.addf %48, %47 : vector<16x32xf32>
    %50 = arith.divf %48, %49 : vector<16x32xf32>
    %c3_28 = arith.constant 3 : index
    %c0_29 = arith.constant 0 : index
    %c0_30 = arith.constant 0 : index
    %51 = vector.load %arg5[%c3_28, %c0_29, %c0_30] : memref<8x16x32xf32, #tpu.memory_space<vmem>>, vector<1x16x32xf32>
    %52 = vector.shape_cast %51 : vector<1x16x32xf32> to vector<16x32xf32>
    %53 = vector.shape_cast %50 : vector<16x32xf32> to vector<1x16x32xf32>
    tpu.vector_store %arg5[%c3_28, %c0_29, %c0_30], %53 {strides = array<i32>} : memref<8x16x32xf32, #tpu.memory_space<vmem>>, vector<1x16x32xf32>,
    %c4 = arith.constant 4 : index
    %c0_31 = arith.constant 0 : index
    %c0_32 = arith.constant 0 : index
    %54 = vector.load %arg2[%c4, %c0_31, %c0_32] : memref<8x16x32xf32, #tpu.memory_space<vmem>>, vector<1x16x32xf32>
    %55 = vector.shape_cast %54 : vector<1x16x32xf32> to vector<16x32xf32>
    %cst_33 = arith.constant dense<0.000000e+00> : vector<16x32xf32>
    %56 = tpu.matmul %0, %55, %cst_33 {dimension_numbers = #tpu.dot_dimension_numbers<[1], [0], [0], [1], [0, 0, 1, 1], [], []>} : vector<16x16xf32>, vector<16x32xf32>, vector<16x32xf32> -> vector<16x32xf32>
    %57 = vector.broadcast %1 : vector<16x1xf32> to vector<16x32xf32>
    %58 = arith.addf %56, %57 : vector<16x32xf32>
    %59 = arith.negf %58 : vector<16x32xf32>
    %60 = math.exp %59 : vector<16x32xf32>
    %cst_34 = arith.constant 1.000000e+00 : f32
    %61 = vector.broadcast %cst_34 : f32 to vector<16x32xf32>
    %62 = arith.addf %61, %60 : vector<16x32xf32>
    %63 = arith.divf %61, %62 : vector<16x32xf32>
    %c4_35 = arith.constant 4 : index
    %c0_36 = arith.constant 0 : index
    %c0_37 = arith.constant 0 : index
    %64 = vector.load %arg5[%c4_35, %c0_36, %c0_37] : memref<8x16x32xf32, #tpu.memory_space<vmem>>, vector<1x16x32xf32>
    %65 = vector.shape_cast %64 : vector<1x16x32xf32> to vector<16x32xf32>
    %66 = vector.shape_cast %63 : vector<16x32xf32> to vector<1x16x32xf32>
    tpu.vector_store %arg5[%c4_35, %c0_36, %c0_37], %66 {strides = array<i32>} : memref<8x16x32xf32, #tpu.memory_space<vmem>>, vector<1x16x32xf32>,
    %c5 = arith.constant 5 : index
    %c0_38 = arith.constant 0 : index
    %c0_39 = arith.constant 0 : index
    %67 = vector.load %arg2[%c5, %c0_38, %c0_39] : memref<8x16x32xf32, #tpu.memory_space<vmem>>, vector<1x16x32xf32>
    %68 = vector.shape_cast %67 : vector<1x16x32xf32> to vector<16x32xf32>
    %cst_40 = arith.constant dense<0.000000e+00> : vector<16x32xf32>
    %69 = tpu.matmul %0, %68, %cst_40 {dimension_numbers = #tpu.dot_dimension_numbers<[1], [0], [0], [1], [0, 0, 1, 1], [], []>} : vector<16x16xf32>, vector<16x32xf32>, vector<16x32xf32> -> vector<16x32xf32>
    %70 = vector.broadcast %1 : vector<16x1xf32> to vector<16x32xf32>
    %71 = arith.addf %69, %70 : vector<16x32xf32>
    %72 = arith.negf %71 : vector<16x32xf32>
    %73 = math.exp %72 : vector<16x32xf32>
    %cst_41 = arith.constant 1.000000e+00 : f32
    %74 = vector.broadcast %cst_41 : f32 to vector<16x32xf32>
    %75 = arith.addf %74, %73 : vector<16x32xf32>
    %76 = arith.divf %74, %75 : vector<16x32xf32>
    %c5_42 = arith.constant 5 : index
    %c0_43 = arith.constant 0 : index
    %c0_44 = arith.constant 0 : index
    %77 = vector.load %arg5[%c5_42, %c0_43, %c0_44] : memref<8x16x32xf32, #tpu.memory_space<vmem>>, vector<1x16x32xf32>
    %78 = vector.shape_cast %77 : vector<1x16x32xf32> to vector<16x32xf32>
    %79 = vector.shape_cast %76 : vector<16x32xf32> to vector<1x16x32xf32>
    tpu.vector_store %arg5[%c5_42, %c0_43, %c0_44], %79 {strides = array<i32>} : memref<8x16x32xf32, #tpu.memory_space<vmem>>, vector<1x16x32xf32>,
    %c6 = arith.constant 6 : index
    %c0_45 = arith.constant 0 : index
    %c0_46 = arith.constant 0 : index
    %80 = vector.load %arg2[%c6, %c0_45, %c0_46] : memref<8x16x32xf32, #tpu.memory_space<vmem>>, vector<1x16x32xf32>
    %81 = vector.shape_cast %80 : vector<1x16x32xf32> to vector<16x32xf32>
    %cst_47 = arith.constant dense<0.000000e+00> : vector<16x32xf32>
    %82 = tpu.matmul %0, %81, %cst_47 {dimension_numbers = #tpu.dot_dimension_numbers<[1], [0], [0], [1], [0, 0, 1, 1], [], []>} : vector<16x16xf32>, vector<16x32xf32>, vector<16x32xf32> -> vector<16x32xf32>
    %83 = vector.broadcast %1 : vector<16x1xf32> to vector<16x32xf32>
    %84 = arith.addf %82, %83 : vector<16x32xf32>
    %85 = arith.negf %84 : vector<16x32xf32>
    %86 = math.exp %85 : vector<16x32xf32>
    %cst_48 = arith.constant 1.000000e+00 : f32
    %87 = vector.broadcast %cst_48 : f32 to vector<16x32xf32>
    %88 = arith.addf %87, %86 : vector<16x32xf32>
    %89 = arith.divf %87, %88 : vector<16x32xf32>
    %c6_49 = arith.constant 6 : index
    %c0_50 = arith.constant 0 : index
    %c0_51 = arith.constant 0 : index
    %90 = vector.load %arg5[%c6_49, %c0_50, %c0_51] : memref<8x16x32xf32, #tpu.memory_space<vmem>>, vector<1x16x32xf32>
    %91 = vector.shape_cast %90 : vector<1x16x32xf32> to vector<16x32xf32>
    %92 = vector.shape_cast %89 : vector<16x32xf32> to vector<1x16x32xf32>
    tpu.vector_store %arg5[%c6_49, %c0_50, %c0_51], %92 {strides = array<i32>} : memref<8x16x32xf32, #tpu.memory_space<vmem>>, vector<1x16x32xf32>,
    %c7 = arith.constant 7 : index
    %c0_52 = arith.constant 0 : index
    %c0_53 = arith.constant 0 : index
    %93 = vector.load %arg2[%c7, %c0_52, %c0_53] : memref<8x16x32xf32, #tpu.memory_space<vmem>>, vector<1x16x32xf32>
    %94 = vector.shape_cast %93 : vector<1x16x32xf32> to vector<16x32xf32>
    %cst_54 = arith.constant dense<0.000000e+00> : vector<16x32xf32>
    %95 = tpu.matmul %0, %94, %cst_54 {dimension_numbers = #tpu.dot_dimension_numbers<[1], [0], [0], [1], [0, 0, 1, 1], [], []>} : vector<16x16xf32>, vector<16x32xf32>, vector<16x32xf32> -> vector<16x32xf32>
    %96 = vector.broadcast %1 : vector<16x1xf32> to vector<16x32xf32>
    %97 = arith.addf %95, %96 : vector<16x32xf32>
    %98 = arith.negf %97 : vector<16x32xf32>
    %99 = math.exp %98 : vector<16x32xf32>
    %cst_55 = arith.constant 1.000000e+00 : f32
    %100 = vector.broadcast %cst_55 : f32 to vector<16x32xf32>
    %101 = arith.addf %100, %99 : vector<16x32xf32>
    %102 = arith.divf %100, %101 : vector<16x32xf32>
    %c7_56 = arith.constant 7 : index
    %c0_57 = arith.constant 0 : index
    %c0_58 = arith.constant 0 : index
    %103 = vector.load %arg5[%c7_56, %c0_57, %c0_58] : memref<8x16x32xf32, #tpu.memory_space<vmem>>, vector<1x16x32xf32>
    %104 = vector.shape_cast %103 : vector<1x16x32xf32> to vector<16x32xf32>
    %105 = vector.shape_cast %102 : vector<16x32xf32> to vector<1x16x32xf32>
    tpu.vector_store %arg5[%c7_56, %c0_57, %c0_58], %105 {strides = array<i32>} : memref<8x16x32xf32, #tpu.memory_space<vmem>>, vector<1x16x32xf32>,
    return
  }
  func.func @transform_0(%arg0: i32, %arg1: i32) -> (i32, i32, i32) {
    %c0_i32 = arith.constant 0 : i32
    %c0_i32_0 = arith.constant 0 : i32
    return %arg0, %c0_i32, %arg1 : i32, i32, i32
  }
  func.func @transform_1(%arg0: i32, %arg1: i32) -> (i32, i32) {
    %c0_i32 = arith.constant 0 : i32
    %c0_i32_0 = arith.constant 0 : i32
    %c0_i32_1 = arith.constant 0 : i32
    return %c0_i32, %c0_i32_0 : i32, i32
  }
  func.func @transform_2(%arg0: i32, %arg1: i32) -> (i32, i32) {
    %c0_i32 = arith.constant 0 : i32
    %c0_i32_0 = arith.constant 0 : i32
    %c0_i32_1 = arith.constant 0 : i32
    return %c0_i32, %c0_i32_0 : i32, i32
  }
  func.func @transform_3(%arg0: i32, %arg1: i32) -> (i32, i32, i32) {
    %c0_i32 = arith.constant 0 : i32
    %c0_i32_0 = arith.constant 0 : i32
    return %arg0, %c0_i32, %arg1 : i32, i32, i32
  }
}

</mosaic_0001>

<llo_original>
// kernel: tpu_custom_call.1
$region0: #{tpu_custom_call.1}
  #allocation0 [shape = 'u32[]', space=smem, size = 0x4, offset = 0x4, fixed_abs, tag = 'smem constant byte address 0x4 - core index']
  #allocation1 [shape = 'u32[144,128]{1,0:T(1,128)}', space=vmem, size = 0x12000, scoped, tag = 'internal scratch']
  %s0 = inlined_call_operand.hbm [shape: f32[16,16,32], index: 0, kind: input, shape index: {}]
  %s1 = inlined_call_operand.vmem [shape: f32[16,16], index: 1, kind: input, shape index: {}]
  %s2 = inlined_call_operand.vmem [shape: f32[16,1], index: 2, kind: input, shape index: {}]
  %s3 = inlined_call_operand.hbm [shape: f32[16,16,32], index: 3, kind: output, shape index: {}]
  %s4 = sld [smem:[#allocation0]]
  $region49: #{tpu_custom_call.1} parent=0
    _
  %s6 = ssub.s32 1, %s4
  %s7 = scalar_select 0, %s6, %s4
  $region1: #{tpu_custom_call.1} parent=0
    #allocation2 [shape = 'u8[131072]{0}', space=vmem, size = 0x20000, scoped, tag = 'input window, operand 0']
    #allocation3 [shape = 's32[2]{0}', space=sflag, size = 0x8, scoped, tag = 'scoped memory for tpu_custom_call.1']
    #allocation4 [shape = 's32[2]{0}', space=sflag, size = 0x8, scoped, tag = 'scoped memory for tpu_custom_call.1']
    #allocation5 [shape = 'u8[131072]{0}', space=vmem, size = 0x20000, scoped, tag = 'output window, operand 0']
    %8 = vsyncpa [#allocation3], 0
    %s9 = scalar_lea.sflag [#allocation3], 1
    %10 = vsyncpa %s9, 0
    %11 = vsyncpa [#allocation4], 0
    %s12 = scalar_lea.sflag [#allocation4], 1
    %13 = vsyncpa %s12, 0
    loop: start=0, step=1, limit=4
    $region2: #{tpu_custom_call.1} parent=1 // loop_pre_header
      _
    $region3: #{tpu_custom_call.1} parent=1 // loop_header
      %s15 = sphi 0, %s19
      %p16 = scmp.ge.s32.totalorder %s15, 4
      %s22 = sphi 0, %s34
      %s23 = sphi 0, %s30
      %s24 = sphi 0, %s22
      %s25 = sphi 0, %s23
      %s26 = sphi 0, %s24
      %s27 = sphi 0, %s25
      %s39 = sphi 0, %s41
      %s42 = sphi 0, %s39
      %s43 = sphi 0, %s42
      %s59 = sphi 0, %s43
      %s63 = sphi 0, %s63
      %s65 = sphi 0, %s63
      %s66 = sphi 0, %s65
      %s80 = sphi 0, %s66
      %s84 = sphi 0, %s84
      %s86 = sphi 0, %s84
      %s87 = sphi 0, %s86
      %s101 = sphi 0, %s87
      %s109 = sphi 0, %s111
      %s112 = sphi 0, %s109
      %s113 = sphi 0, %s112
      %s129 = sphi 0, %s113
    $region4: #{tpu_custom_call.1} parent=1 // loop_header_branch
      %18 = sbr.rel (%p16) target = $region8
    $region5: #{tpu_custom_call.1} parent=1 // loop_body
      %s20 = ssub.s32 %s15, 1
      %s21 = ssub.s32 %s15, 2
      %s28 = sadd.s32 1, %s23
      %p29 = scmp.ge.s32.totalorder %s28, 1
      %s30 = scalar_select %p29, 0, %s28
      %s31 = sadd.s32 1, %s22
      %s32 = scalar_select %p29, %s31, %s22
      %p33 = scmp.ge.s32.totalorder %s32, 2
      %s34 = scalar_select %p33, 0, %s32
      %s35 = ssub.s32 %s22, %s34
      %s36 = ssub.s32 %s23, %s30
      %s37 = sor.u32 %s35, %s36
      %p38 = scmp.eq.s32.totalorder %s37, 0
      %s40 = sadd.s32 %s39, 1
      %s41 = scalar_select %p38, %s39, %s40
      %p44 = pneg %p38
      %p45 = scmp.eq.s32.totalorder %s15, 1
      %p46 = por %p44, %p45
      %p47 = scmp.ne.s32.totalorder %s39, %s42
      %p48 = scmp.eq.s32.totalorder %s15, 0
      %p49 = por %p47, %p48
      %p50 = scmp.ne.s32.totalorder %s39, %s42
      %p51 = scmp.eq.s32.totalorder %s20, 1
      %p52 = por %p50, %p51
      %p53 = scmp.ne.s32.totalorder %s42, %s43
      %p54 = scmp.eq.s32.totalorder %s20, 0
      %p55 = por %p53, %p54
      %p56 = scmp.ne.s32.totalorder %s42, %s43
      %p57 = scmp.eq.s32.totalorder %s21, 1
      %p58 = por %p56, %p57
      %p60 = scmp.ne.s32.totalorder %s43, %s59
      %p61 = scmp.eq.s32.totalorder %s21, 0
      %p62 = por %p60, %p61
      %s64 = sadd.s32 %s63, 1
      %p67 = scmp.eq.s32.totalorder %s15, 1
      %p68 = scmp.ne.s32.totalorder %s63, %s65
      %p69 = scmp.eq.s32.totalorder %s15, 0
      %p70 = por %p68, %p69
      %p71 = scmp.ne.s32.totalorder %s63, %s65
      %p72 = scmp.eq.s32.totalorder %s20, 1
      %p73 = por %p71, %p72
      %p74 = scmp.ne.s32.totalorder %s65, %s66
      %p75 = scmp.eq.s32.totalorder %s20, 0
      %p76 = por %p74, %p75
      %p77 = scmp.ne.s32.totalorder %s65, %s66
      %p78 = scmp.eq.s32.totalorder %s21, 1
      %p79 = por %p77, %p78
      %p81 = scmp.ne.s32.totalorder %s66, %s80
      %p82 = scmp.eq.s32.totalorder %s21, 0
      %p83 = por %p81, %p82
      %s85 = sadd.s32 %s84, 1
      %p88 = scmp.eq.s32.totalorder %s15, 1
      %p89 = scmp.ne.s32.totalorder %s84, %s86
      %p90 = scmp.eq.s32.totalorder %s15, 0
      %p91 = por %p89, %p90
      %p92 = scmp.ne.s32.totalorder %s84, %s86
      %p93 = scmp.eq.s32.totalorder %s20, 1
      %p94 = por %p92, %p93
      %p95 = scmp.ne.s32.totalorder %s86, %s87
      %p96 = scmp.eq.s32.totalorder %s20, 0
      %p97 = por %p95, %p96
      %p98 = scmp.ne.s32.totalorder %s86, %s87
      %p99 = scmp.eq.s32.totalorder %s21, 1
      %p100 = por %p98, %p99
      %p102 = scmp.ne.s32.totalorder %s87, %s101
      %p103 = scmp.eq.s32.totalorder %s21, 0
      %p104 = por %p102, %p103
      %s105 = ssub.s32 %s22, %s34
      %s106 = ssub.s32 %s23, %s30
      %s107 = sor.u32 %s105, %s106
      %p108 = scmp.eq.s32.totalorder %s107, 0
      %s110 = sadd.s32 %s109, 1
      %s111 = scalar_select %p108, %s109, %s110
      %p114 = pneg %p108
      %p115 = scmp.eq.s32.totalorder %s15, 1
      %p116 = por %p114, %p115
      %p117 = scmp.ne.s32.totalorder %s109, %s112
      %p118 = scmp.eq.s32.totalorder %s15, 0
      %p119 = por %p117, %p118
      %p120 = scmp.ne.s32.totalorder %s109, %s112
      %p121 = scmp.eq.s32.totalorder %s20, 1
      %p122 = por %p120, %p121
      %p123 = scmp.ne.s32.totalorder %s112, %s113
      %p124 = scmp.eq.s32.totalorder %s20, 0
      %p125 = por %p123, %p124
      %p126 = scmp.ne.s32.totalorder %s112, %s113
      %p127 = scmp.eq.s32.totalorder %s21, 1
      %p128 = por %p126, %p127
      %p130 = scmp.ne.s32.totalorder %s113, %s129
      %p131 = scmp.eq.s32.totalorder %s21, 0
      %p132 = por %p130, %p131
      %p133 = scmp.le.s32.totalorder 1, %s15
      %p134 = scmp.lt.s32.totalorder %s15, 3
      %p135 = pnand %p133, %p134
      %p136 = pneg %p135
      // Predicated region
      $region9: #{tpu_custom_call.1} parent=5 // pred_check
        _
      $region10: #{tpu_custom_call.1} parent=5 // pred_check_branch
        %138 = sbr.rel (%p135) target = $region12
      $region11: #{tpu_custom_call.1} parent=5 // pred_region
        %s139 = ssub.s32 %s15, 1
        // Predicated region
        $region13: #{tpu_custom_call.1} parent=11 // pred_check
          %p140 = pneg %p76
        $region14: #{tpu_custom_call.1} parent=11 // pred_check_branch
          %142 = sbr.rel (%p140) target = $region16
        $region15: #{tpu_custom_call.1} parent=11 // pred_region
          _
        $region16: #{tpu_custom_call.1} parent=11 // pred_fallthru
          _
        // Predicated region
        $region17: #{tpu_custom_call.1} parent=11 // pred_check
          %p143 = pneg %p97
        $region18: #{tpu_custom_call.1} parent=11 // pred_check_branch
          %145 = sbr.rel (%p143) target = $region20
        $region19: #{tpu_custom_call.1} parent=11 // pred_region
          _
        $region20: #{tpu_custom_call.1} parent=11 // pred_fallthru
          _
      $region12: #{tpu_custom_call.1} parent=5 // pred_fallthru
        _
      %p146 = scmp.lt.s32.totalorder %s15, 2
      // Predicated region
      $region21: #{tpu_custom_call.1} parent=5 // pred_check
        %p147 = pneg %p146
      $region22: #{tpu_custom_call.1} parent=5 // pred_check_branch
        %149 = sbr.rel (%p147) target = $region24
      $region23: #{tpu_custom_call.1} parent=5 // pred_region
        // Predicated region
        $region25: #{tpu_custom_call.1} parent=23 // pred_check
          %p150 = pneg %p49
        $region26: #{tpu_custom_call.1} parent=23 // pred_check_branch
          %152 = sbr.rel (%p150) target = $region28
        $region27: #{tpu_custom_call.1} parent=23 // pred_region
          %s153 = sand.u32 %s39, 1
          %s154 = scalar_lea.sflag [#allocation3], %s153
          %s155 = sand.u32 %s39, 1
          %s156 = smul.addr %s155, 128
          %s157 = scalar_lea.vmem [#allocation2], %s156
          %s158 = smul.u32 8, %s22
          %s160 = ssub.s32 2048, 2048
          %161 = vsyncadd %s154, %s160
          %s162 = smul.addr %s158, 2
          %s163 = sadd.s32 %s23, %s162
          %s164 = smul.addr %s163, 128
          %s165 = scalar_lea.hbm %s0, %s164
          %s166 = sshll.u32 %s157, 4
          %s167 = int_to_ptr.vmem [resolvable:$true] %s166
          %172 = dma.hbm_to_vmem [thread:$0]  %s165, 2048, %s167, %s154, 128, 128, 8
        $region28: #{tpu_custom_call.1} parent=23 // pred_fallthru
          _
      $region24: #{tpu_custom_call.1} parent=5 // pred_fallthru
        _
      %p173 = scmp.le.s32.totalorder 1, %s15
      %p174 = scmp.lt.s32.totalorder %s15, 3
      %p175 = pnand %p173, %p174
      %p176 = pneg %p175
      // Predicated region
      $region29: #{tpu_custom_call.1} parent=5 // pred_check
        _
      $region30: #{tpu_custom_call.1} parent=5 // pred_check_branch
        %178 = sbr.rel (%p175) target = $region32
      $region31: #{tpu_custom_call.1} parent=5 // pred_region
        %s179 = ssub.s32 %s15, 1
        %s180 = sand.u32 %s42, 1
        %s181 = scalar_lea.sflag [#allocation3], %s180
        %s182 = sand.u32 %s42, 1
        %s183 = smul.addr %s182, 128
        %s184 = scalar_lea.vmem [#allocation2], %s183
        // Predicated region
        $region33: #{tpu_custom_call.1} parent=31 // pred_check
          %p185 = pneg %p55
        $region34: #{tpu_custom_call.1} parent=31 // pred_check_branch
          %187 = sbr.rel (%p185) target = $region36
        $region35: #{tpu_custom_call.1} parent=31 // pred_region
          %188 = dma.done %s181, 2048
        $region36: #{tpu_custom_call.1} parent=31 // pred_fallthru
          _
        %s189 = sand.u32 %s42, 1
        %s190 = scalar_lea.sflag [#allocation3], %s189
        %s191 = sand.u32 %s42, 1
        %s192 = smul.addr %s191, 128
        %s193 = scalar_lea.vmem [#allocation2], %s192
        %p194 = pneg %p55
        %p195 = pneg %p52
        %p196 = pneg %p76
        %p197 = pneg %p73
        %p198 = pneg %p97
        %p199 = pneg %p94
        %p200 = pneg %p125
        %p201 = pneg %p122
        %s202 = sand.u32 %s112, 1
        %s203 = scalar_lea.sflag [#allocation4], %s202
        %s204 = sand.u32 %s112, 1
        %s205 = smul.addr %s204, 128
        %s206 = scalar_lea.vmem [#allocation5], %s205
        %s207 = smul.u32 8, %s24
        %s208 = smul.u32 8, %s24
        %v209 = vld [vmem:[%s1] sm:$0xff]
        %v210 = vld [vmem:[%s1 + $0x8] sm:$0xff]
        %v211 = vld [vmem:[%s2] sm:$0xff]
        %v212 = vld [vmem:[%s2 + $0x8] sm:$0xff]
        %v213 = vld [vmem:[%s184] sm:$0xff]
        %v214 = vld [vmem:[%s184 + $0x8] sm:$0xff]
        %216 = vset.pattern.permute.xlu0 0
        %217 = vperm.xlu0 %216, %v211
        %v218 = vpop.permute.xlu0 %217
        %221 = vset.pattern.permute.xlu0 0
        %222 = vperm.xlu0 %221, %v212
        %v223 = vpop.permute.xlu0 %222
        %vm225 = vcmask 130048
        %v227 = vsel %vm225, %v209, 0
        %v230 = vsel %vm225, %v210, 0
        %232 = vmatprep.subr.mxu0 0.0
        %233 = vmatpush1.msra.mxu0 %v213
        %234 = vmatprep.subr.mxu0 0.0
        %235 = vmatpush1.msra.mxu0 %v214
        %236 = vmatprep.subr.mxu0 0.0
        %237 = vmatpush1.msra.mxu0 0.0
        %238 = vmatprep.subr.mxu0 0.0
        %239 = vmatpush1.msra.mxu0 0.0
        %240 = vmatprep.subr.mxu0 0.0
        %241 = vmatpush1.msra.mxu0 0.0
        %242 = vmatprep.subr.mxu0 0.0
        %243 = vmatpush1.msra.mxu0 0.0
        %244 = vmatprep.subr.mxu0 0.0
        %245 = vmatpush1.msra.mxu0 0.0
        %246 = vmatprep.subr.mxu0 0.0
        %247 = vmatpush1.msra.mxu0 0.0
        %248 = vmatprep.subr.mxu0 0.0
        %249 = vmatpush1.msra.mxu0 0.0
        %250 = vmatprep.subr.mxu0 0.0
        %251 = vmatpush1.msra.mxu0 0.0
        %252 = vmatprep.subr.mxu0 0.0
        %253 = vmatpush1.msra.mxu0 0.0
        %254 = vmatprep.subr.mxu0 0.0
        %255 = vmatpush1.msra.mxu0 0.0
        %256 = vmatprep.subr.mxu0 0.0
        %257 = vmatpush1.msra.mxu0 0.0
        %258 = vmatprep.subr.mxu0 0.0
        %259 = vmatpush1.msra.mxu0 0.0
        %260 = vmatprep.subr.mxu0 0.0
        %261 = vmatpush1.msra.mxu0 0.0
        %262 = vmatprep.subr.mxu0 0.0
        %263 = vmatpush1.msra.mxu0 0.0
        %264 = vmatprep.subr.mxu0 0.0
        %265 = vmatpush1.msra.mxu0 0.0
        %266 = vmatprep.subr.mxu0 0.0
        %267 = vmatpush1.msra.mxu0 0.0
        %268 = vmatprep.subr.mxu0 0.0
        %269 = vmatpush1.msra.mxu0 0.0
        %270 = vmatprep.subr.mxu0 0.0
        %271 = vmatpush1.msra.mxu0 0.0
        %272 = vmatprep.subr.mxu0 0.0
        %273 = vmatpush1.msra.mxu0 0.0
        %274 = vmatprep.subr.mxu0 0.0
        %275 = vmatpush1.msra.mxu0 0.0
        %276 = vmatprep.subr.mxu0 0.0
        %277 = vmatpush1.msra.mxu0 0.0
        %278 = vmatprep.subr.mxu0 0.0
        %279 = vmatpush1.msra.mxu0 0.0
        %280 = vmatprep.subr.mxu0 0.0
        %281 = vmatpush1.msra.mxu0 0.0
        %282 = vmatprep.subr.mxu0 0.0
        %283 = vmatpush1.msra.mxu0 0.0
        %284 = vmatprep.subr.mxu0 0.0
        %285 = vmatpush1.msra.mxu0 0.0
        %286 = vmatprep.subr.mxu0 0.0
        %287 = vmatpush1.msra.mxu0 0.0
        %288 = vmatprep.subr.mxu0 0.0
        %289 = vmatpush1.msra.mxu0 0.0
        %290 = vmatprep.subr.mxu0 0.0
        %291 = vmatpush1.msra.mxu0 0.0
        %292 = vmatprep.subr.mxu0 0.0
        %293 = vmatpush1.msra.mxu0 0.0
        %294 = vmatprep.subr.mxu0 0.0
        %295 = vmatpush1.msra.mxu0 0.0
        %296 = vmatprep.mubr.f32.mxu0 0.0
        %297 = vmatmul.mubr.f32.gmra.mrb[0].mxu0 %v227
        %v298 = vpop.f32.mrb[0].mxu0
        %v299 = vadd.f32 %v218, %v298
        %v300 = vpop.f32.mrb[0].mxu0
        %301 = vmatprep.mubr.f32.mxu0 0.0
        %302 = vmatmul.mubr.f32.gmra.mrb[0].mxu0 %v230
        %v303 = vpop.f32.mrb[0].mxu0
        %v304 = vadd.f32 %v223, %v303
        %v305 = vpop.f32.mrb[0].mxu0
        %306 = vdwg.mxu0
        %v307 = vxor.u32 %v299, 2147483648
        %v308 = vxor.u32 %v304, 2147483648
        %v309 = vmul.f32 %v307, 1.442695
        %v310 = vpow.pop %v309
        %v311 = vmul.f32 %v308, 1.442695
        %v312 = vpow.pop %v311
        %v313 = vadd.f32 %v310, 1.0
        %v314 = vadd.f32 %v312, 1.0
        %v315 = vrcp.pop %v313
        %v316 = vmul.f32 1.0, %v315
        %v317 = vrcp.pop %v314
        %v318 = vmul.f32 1.0, %v317
        %vm319 = vcmask 261120
        %320 = vst.msk [vmem:[%s206] sm:$0xff] %vm319, %v316
        %321 = vst.msk [vmem:[%s206 + $0x8] sm:$0xff] %vm319, %v318
        %s322 = scalar_lea.vmem %s184, 16 [#allocation2]
        %v323 = vld [vmem:[%s322] sm:$0xff]
        %v324 = vld [vmem:[%s322 + $0x8] sm:$0xff]
        %325 = vmatprep.subr.mxu0 0.0
        %326 = vmatpush1.msra.mxu0 %v323
        %327 = vmatprep.subr.mxu0 0.0
        %328 = vmatpush1.msra.mxu0 %v324
        %329 = vmatprep.subr.mxu0 0.0
        %330 = vmatpush1.msra.mxu0 0.0
        %331 = vmatprep.subr.mxu0 0.0
        %332 = vmatpush1.msra.mxu0 0.0
        %333 = vmatprep.subr.mxu0 0.0
        %334 = vmatpush1.msra.mxu0 0.0
        %335 = vmatprep.subr.mxu0 0.0
        %336 = vmatpush1.msra.mxu0 0.0
        %337 = vmatprep.subr.mxu0 0.0
        %338 = vmatpush1.msra.mxu0 0.0
        %339 = vmatprep.subr.mxu0 0.0
        %340 = vmatpush1.msra.mxu0 0.0
        %341 = vmatprep.subr.mxu0 0.0
        %342 = vmatpush1.msra.mxu0 0.0
        %343 = vmatprep.subr.mxu0 0.0
        %344 = vmatpush1.msra.mxu0 0.0
        %345 = vmatprep.subr.mxu0 0.0
        %346 = vmatpush1.msra.mxu0 0.0
        %347 = vmatprep.subr.mxu0 0.0
        %348 = vmatpush1.msra.mxu0 0.0
        %349 = vmatprep.subr.mxu0 0.0
        %350 = vmatpush1.msra.mxu0 0.0
        %351 = vmatprep.subr.mxu0 0.0
        %352 = vmatpush1.msra.mxu0 0.0
        %353 = vmatprep.subr.mxu0 0.0
        %354 = vmatpush1.msra.mxu0 0.0
        %355 = vmatprep.subr.mxu0 0.0
        %356 = vmatpush1.msra.mxu0 0.0
        %357 = vmatprep.subr.mxu0 0.0
        %358 = vmatpush1.msra.mxu0 0.0
        %359 = vmatprep.subr.mxu0 0.0
        %360 = vmatpush1.msra.mxu0 0.0
        %361 = vmatprep.subr.mxu0 0.0
        %362 = vmatpush1.msra.mxu0 0.0
        %363 = vmatprep.subr.mxu0 0.0
        %364 = vmatpush1.msra.mxu0 0.0
        %365 = vmatprep.subr.mxu0 0.0
        %366 = vmatpush1.msra.mxu0 0.0
        %367 = vmatprep.subr.mxu0 0.0
        %368 = vmatpush1.msra.mxu0 0.0
        %369 = vmatprep.subr.mxu0 0.0
        %370 = vmatpush1.msra.mxu0 0.0
        %371 = vmatprep.subr.mxu0 0.0
        %372 = vmatpush1.msra.mxu0 0.0
        %373 = vmatprep.subr.mxu0 0.0
        %374 = vmatpush1.msra.mxu0 0.0
        %375 = vmatprep.subr.mxu0 0.0
        %376 = vmatpush1.msra.mxu0 0.0
        %377 = vmatprep.subr.mxu0 0.0
        %378 = vmatpush1.msra.mxu0 0.0
        %379 = vmatprep.subr.mxu0 0.0
        %380 = vmatpush1.msra.mxu0 0.0
        %381 = vmatprep.subr.mxu0 0.0
        %382 = vmatpush1.msra.mxu0 0.0
        %383 = vmatprep.subr.mxu0 0.0
        %384 = vmatpush1.msra.mxu0 0.0
        %385 = vmatprep.subr.mxu0 0.0
        %386 = vmatpush1.msra.mxu0 0.0
        %387 = vmatprep.subr.mxu0 0.0
        %388 = vmatpush1.msra.mxu0 0.0
        %389 = vmatprep.mubr.f32.mxu0 0.0
        %390 = vmatmul.mubr.f32.gmra.mrb[0].mxu0 %v227
        %v391 = vpop.f32.mrb[0].mxu0
        %v392 = vadd.f32 %v218, %v391
        %v393 = vpop.f32.mrb[0].mxu0
        %394 = vmatprep.mubr.f32.mxu0 0.0
        %395 = vmatmul.mubr.f32.gmra.mrb[0].mxu0 %v230
        %v396 = vpop.f32.mrb[0].mxu0
        %v397 = vadd.f32 %v223, %v396
        %v398 = vpop.f32.mrb[0].mxu0
        %399 = vdwg.mxu0
        %v400 = vxor.u32 %v392, 2147483648
        %v401 = vxor.u32 %v397, 2147483648
        %v402 = vmul.f32 %v400, 1.442695
        %v403 = vpow.pop %v402
        %v404 = vmul.f32 %v401, 1.442695
        %v405 = vpow.pop %v404
        %v406 = vadd.f32 %v403, 1.0
        %v407 = vadd.f32 %v405, 1.0
        %v408 = vrcp.pop %v406
        %v409 = vmul.f32 1.0, %v408
        %v410 = vrcp.pop %v407
        %v411 = vmul.f32 1.0, %v410
        %s412 = scalar_lea.vmem %s206, 16 [#allocation5]
        %413 = vst.msk [vmem:[%s412] sm:$0xff] %vm319, %v409
        %414 = vst.msk [vmem:[%s412 + $0x8] sm:$0xff] %vm319, %v411
        %s415 = scalar_lea.vmem %s184, 32 [#allocation2]
        %v416 = vld [vmem:[%s415] sm:$0xff]
        %v417 = vld [vmem:[%s415 + $0x8] sm:$0xff]
        %418 = vmatprep.subr.mxu0 0.0
        %419 = vmatpush1.msra.mxu0 %v416
        %420 = vmatprep.subr.mxu0 0.0
        %421 = vmatpush1.msra.mxu0 %v417
        %422 = vmatprep.subr.mxu0 0.0
        %423 = vmatpush1.msra.mxu0 0.0
        %424 = vmatprep.subr.mxu0 0.0
        %425 = vmatpush1.msra.mxu0 0.0
        %426 = vmatprep.subr.mxu0 0.0
        %427 = vmatpush1.msra.mxu0 0.0
        %428 = vmatprep.subr.mxu0 0.0
        %429 = vmatpush1.msra.mxu0 0.0
        %430 = vmatprep.subr.mxu0 0.0
        %431 = vmatpush1.msra.mxu0 0.0
        %432 = vmatprep.subr.mxu0 0.0
        %433 = vmatpush1.msra.mxu0 0.0
        %434 = vmatprep.subr.mxu0 0.0
        %435 = vmatpush1.msra.mxu0 0.0
        %436 = vmatprep.subr.mxu0 0.0
        %437 = vmatpush1.msra.mxu0 0.0
        %438 = vmatprep.subr.mxu0 0.0
        %439 = vmatpush1.msra.mxu0 0.0
        %440 = vmatprep.subr.mxu0 0.0
        %441 = vmatpush1.msra.mxu0 0.0
        %442 = vmatprep.subr.mxu0 0.0
        %443 = vmatpush1.msra.mxu0 0.0
        %444 = vmatprep.subr.mxu0 0.0
        %445 = vmatpush1.msra.mxu0 0.0
        %446 = vmatprep.subr.mxu0 0.0
        %447 = vmatpush1.msra.mxu0 0.0
        %448 = vmatprep.subr.mxu0 0.0
        %449 = vmatpush1.msra.mxu0 0.0
        %450 = vmatprep.subr.mxu0 0.0
        %451 = vmatpush1.msra.mxu0 0.0
        %452 = vmatprep.subr.mxu0 0.0
        %453 = vmatpush1.msra.mxu0 0.0
        %454 = vmatprep.subr.mxu0 0.0
        %455 = vmatpush1.msra.mxu0 0.0
        %456 = vmatprep.subr.mxu0 0.0
        %457 = vmatpush1.msra.mxu0 0.0
        %458 = vmatprep.subr.mxu0 0.0
        %459 = vmatpush1.msra.mxu0 0.0
        %460 = vmatprep.subr.mxu0 0.0
        %461 = vmatpush1.msra.mxu0 0.0
        %462 = vmatprep.subr.mxu0 0.0
        %463 = vmatpush1.msra.mxu0 0.0
        %464 = vmatprep.subr.mxu0 0.0
        %465 = vmatpush1.msra.mxu0 0.0
        %466 = vmatprep.subr.mxu0 0.0
        %467 = vmatpush1.msra.mxu0 0.0
        %468 = vmatprep.subr.mxu0 0.0
        %469 = vmatpush1.msra.mxu0 0.0
        %470 = vmatprep.subr.mxu0 0.0
        %471 = vmatpush1.msra.mxu0 0.0
        %472 = vmatprep.subr.mxu0 0.0
        %473 = vmatpush1.msra.mxu0 0.0
        %474 = vmatprep.subr.mxu0 0.0
        %475 = vmatpush1.msra.mxu0 0.0
        %476 = vmatprep.subr.mxu0 0.0
        %477 = vmatpush1.msra.mxu0 0.0
        %478 = vmatprep.subr.mxu0 0.0
        %479 = vmatpush1.msra.mxu0 0.0
        %480 = vmatprep.subr.mxu0 0.0
        %481 = vmatpush1.msra.mxu0 0.0
        %482 = vmatprep.mubr.f32.mxu0 0.0
        %483 = vmatmul.mubr.f32.gmra.mrb[0].mxu0 %v227
        %v484 = vpop.f32.mrb[0].mxu0
        %v485 = vadd.f32 %v218, %v484
        %v486 = vpop.f32.mrb[0].mxu0
        %487 = vmatprep.mubr.f32.mxu0 0.0
        %488 = vmatmul.mubr.f32.gmra.mrb[0].mxu0 %v230
        %v489 = vpop.f32.mrb[0].mxu0
        %v490 = vadd.f32 %v223, %v489
        %v491 = vpop.f32.mrb[0].mxu0
        %492 = vdwg.mxu0
        %v493 = vxor.u32 %v485, 2147483648
        %v494 = vxor.u32 %v490, 2147483648
        %v495 = vmul.f32 %v493, 1.442695
        %v496 = vpow.pop %v495
        %v497 = vmul.f32 %v494, 1.442695
        %v498 = vpow.pop %v497
        %v499 = vadd.f32 %v496, 1.0
        %v500 = vadd.f32 %v498, 1.0
        %v501 = vrcp.pop %v499
        %v502 = vmul.f32 1.0, %v501
        %v503 = vrcp.pop %v500
        %v504 = vmul.f32 1.0, %v503
        %s505 = scalar_lea.vmem %s206, 32 [#allocation5]
        %506 = vst.msk [vmem:[%s505] sm:$0xff] %vm319, %v502
        %507 = vst.msk [vmem:[%s505 + $0x8] sm:$0xff] %vm319, %v504
        %s508 = scalar_lea.vmem %s184, 48 [#allocation2]
        %v509 = vld [vmem:[%s508] sm:$0xff]
        %v510 = vld [vmem:[%s508 + $0x8] sm:$0xff]
        %511 = vmatprep.subr.mxu0 0.0
        %512 = vmatpush1.msra.mxu0 %v509
        %513 = vmatprep.subr.mxu0 0.0
        %514 = vmatpush1.msra.mxu0 %v510
        %515 = vmatprep.subr.mxu0 0.0
        %516 = vmatpush1.msra.mxu0 0.0
        %517 = vmatprep.subr.mxu0 0.0
        %518 = vmatpush1.msra.mxu0 0.0
        %519 = vmatprep.subr.mxu0 0.0
        %520 = vmatpush1.msra.mxu0 0.0
        %521 = vmatprep.subr.mxu0 0.0
        %522 = vmatpush1.msra.mxu0 0.0
        %523 = vmatprep.subr.mxu0 0.0
        %524 = vmatpush1.msra.mxu0 0.0
        %525 = vmatprep.subr.mxu0 0.0
        %526 = vmatpush1.msra.mxu0 0.0
        %527 = vmatprep.subr.mxu0 0.0
        %528 = vmatpush1.msra.mxu0 0.0
        %529 = vmatprep.subr.mxu0 0.0
        %530 = vmatpush1.msra.mxu0 0.0
        %531 = vmatprep.subr.mxu0 0.0
        %532 = vmatpush1.msra.mxu0 0.0
        %533 = vmatprep.subr.mxu0 0.0
        %534 = vmatpush1.msra.mxu0 0.0
        %535 = vmatprep.subr.mxu0 0.0
        %536 = vmatpush1.msra.mxu0 0.0
        %537 = vmatprep.subr.mxu0 0.0
        %538 = vmatpush1.msra.mxu0 0.0
        %539 = vmatprep.subr.mxu0 0.0
        %540 = vmatpush1.msra.mxu0 0.0
        %541 = vmatprep.subr.mxu0 0.0
        %542 = vmatpush1.msra.mxu0 0.0
        %543 = vmatprep.subr.mxu0 0.0
        %544 = vmatpush1.msra.mxu0 0.0
        %545 = vmatprep.subr.mxu0 0.0
        %546 = vmatpush1.msra.mxu0 0.0
        %547 = vmatprep.subr.mxu0 0.0
        %548 = vmatpush1.msra.mxu0 0.0
        %549 = vmatprep.subr.mxu0 0.0
        %550 = vmatpush1.msra.mxu0 0.0
        %551 = vmatprep.subr.mxu0 0.0
        %552 = vmatpush1.msra.mxu0 0.0
        %553 = vmatprep.subr.mxu0 0.0
        %554 = vmatpush1.msra.mxu0 0.0
        %555 = vmatprep.subr.mxu0 0.0
        %556 = vmatpush1.msra.mxu0 0.0
        %557 = vmatprep.subr.mxu0 0.0
        %558 = vmatpush1.msra.mxu0 0.0
        %559 = vmatprep.subr.mxu0 0.0
        %560 = vmatpush1.msra.mxu0 0.0
        %561 = vmatprep.subr.mxu0 0.0
        %562 = vmatpush1.msra.mxu0 0.0
        %563 = vmatprep.subr.mxu0 0.0
        %564 = vmatpush1.msra.mxu0 0.0
        %565 = vmatprep.subr.mxu0 0.0
        %566 = vmatpush1.msra.mxu0 0.0
        %567 = vmatprep.subr.mxu0 0.0
        %568 = vmatpush1.msra.mxu0 0.0
        %569 = vmatprep.subr.mxu0 0.0
        %570 = vmatpush1.msra.mxu0 0.0
        %571 = vmatprep.subr.mxu0 0.0
        %572 = vmatpush1.msra.mxu0 0.0
        %573 = vmatprep.subr.mxu0 0.0
        %574 = vmatpush1.msra.mxu0 0.0
        %575 = vmatprep.mubr.f32.mxu0 0.0
        %576 = vmatmul.mubr.f32.gmra.mrb[0].mxu0 %v227
        %v577 = vpop.f32.mrb[0].mxu0
        %v578 = vadd.f32 %v218, %v577
        %v579 = vpop.f32.mrb[0].mxu0
        %580 = vmatprep.mubr.f32.mxu0 0.0
        %581 = vmatmul.mubr.f32.gmra.mrb[0].mxu0 %v230
        %v582 = vpop.f32.mrb[0].mxu0
        %v583 = vadd.f32 %v223, %v582
        %v584 = vpop.f32.mrb[0].mxu0
        %585 = vdwg.mxu0
        %v586 = vxor.u32 %v578, 2147483648
        %v587 = vxor.u32 %v583, 2147483648
        %v588 = vmul.f32 %v586, 1.442695
        %v589 = vpow.pop %v588
        %v590 = vmul.f32 %v587, 1.442695
        %v591 = vpow.pop %v590
        %v592 = vadd.f32 %v589, 1.0
        %v593 = vadd.f32 %v591, 1.0
        %v594 = vrcp.pop %v592
        %v595 = vmul.f32 1.0, %v594
        %v596 = vrcp.pop %v593
        %v597 = vmul.f32 1.0, %v596
        %s598 = scalar_lea.vmem %s206, 48 [#allocation5]
        %599 = vst.msk [vmem:[%s598] sm:$0xff] %vm319, %v595
        %600 = vst.msk [vmem:[%s598 + $0x8] sm:$0xff] %vm319, %v597
        %s601 = scalar_lea.vmem %s184, 64 [#allocation2]
        %v602 = vld [vmem:[%s601] sm:$0xff]
        %v603 = vld [vmem:[%s601 + $0x8] sm:$0xff]
        %604 = vmatprep.subr.mxu0 0.0
        %605 = vmatpush1.msra.mxu0 %v602
        %606 = vmatprep.subr.mxu0 0.0
        %607 = vmatpush1.msra.mxu0 %v603
        %608 = vmatprep.subr.mxu0 0.0
        %609 = vmatpush1.msra.mxu0 0.0
        %610 = vmatprep.subr.mxu0 0.0
        %611 = vmatpush1.msra.mxu0 0.0
        %612 = vmatprep.subr.mxu0 0.0
        %613 = vmatpush1.msra.mxu0 0.0
        %614 = vmatprep.subr.mxu0 0.0
        %615 = vmatpush1.msra.mxu0 0.0
        %616 = vmatprep.subr.mxu0 0.0
        %617 = vmatpush1.msra.mxu0 0.0
        %618 = vmatprep.subr.mxu0 0.0
        %619 = vmatpush1.msra.mxu0 0.0
        %620 = vmatprep.subr.mxu0 0.0
        %621 = vmatpush1.msra.mxu0 0.0
        %622 = vmatprep.subr.mxu0 0.0
        %623 = vmatpush1.msra.mxu0 0.0
        %624 = vmatprep.subr.mxu0 0.0
        %625 = vmatpush1.msra.mxu0 0.0
        %626 = vmatprep.subr.mxu0 0.0
        %627 = vmatpush1.msra.mxu0 0.0
        %628 = vmatprep.subr.mxu0 0.0
        %629 = vmatpush1.msra.mxu0 0.0
        %630 = vmatprep.subr.mxu0 0.0
        %631 = vmatpush1.msra.mxu0 0.0
        %632 = vmatprep.subr.mxu0 0.0
        %633 = vmatpush1.msra.mxu0 0.0
        %634 = vmatprep.subr.mxu0 0.0
        %635 = vmatpush1.msra.mxu0 0.0
        %636 = vmatprep.subr.mxu0 0.0
        %637 = vmatpush1.msra.mxu0 0.0
        %638 = vmatprep.subr.mxu0 0.0
        %639 = vmatpush1.msra.mxu0 0.0
        %640 = vmatprep.subr.mxu0 0.0
        %641 = vmatpush1.msra.mxu0 0.0
        %642 = vmatprep.subr.mxu0 0.0
        %643 = vmatpush1.msra.mxu0 0.0
        %644 = vmatprep.subr.mxu0 0.0
        %645 = vmatpush1.msra.mxu0 0.0
        %646 = vmatprep.subr.mxu0 0.0
        %647 = vmatpush1.msra.mxu0 0.0
        %648 = vmatprep.subr.mxu0 0.0
        %649 = vmatpush1.msra.mxu0 0.0
        %650 = vmatprep.subr.mxu0 0.0
        %651 = vmatpush1.msra.mxu0 0.0
        %652 = vmatprep.subr.mxu0 0.0
        %653 = vmatpush1.msra.mxu0 0.0
        %654 = vmatprep.subr.mxu0 0.0
        %655 = vmatpush1.msra.mxu0 0.0
        %656 = vmatprep.subr.mxu0 0.0
        %657 = vmatpush1.msra.mxu0 0.0
        %658 = vmatprep.subr.mxu0 0.0
        %659 = vmatpush1.msra.mxu0 0.0
        %660 = vmatprep.subr.mxu0 0.0
        %661 = vmatpush1.msra.mxu0 0.0
        %662 = vmatprep.subr.mxu0 0.0
        %663 = vmatpush1.msra.mxu0 0.0
        %664 = vmatprep.subr.mxu0 0.0
        %665 = vmatpush1.msra.mxu0 0.0
        %666 = vmatprep.subr.mxu0 0.0
        %667 = vmatpush1.msra.mxu0 0.0
        %668 = vmatprep.mubr.f32.mxu0 0.0
        %669 = vmatmul.mubr.f32.gmra.mrb[0].mxu0 %v227
        %v670 = vpop.f32.mrb[0].mxu0
        %v671 = vadd.f32 %v218, %v670
        %v672 = vpop.f32.mrb[0].mxu0
        %673 = vmatprep.mubr.f32.mxu0 0.0
        %674 = vmatmul.mubr.f32.gmra.mrb[0].mxu0 %v230
        %v675 = vpop.f32.mrb[0].mxu0
        %v676 = vadd.f32 %v223, %v675
        %v677 = vpop.f32.mrb[0].mxu0
        %678 = vdwg.mxu0
        %v679 = vxor.u32 %v671, 2147483648
        %v680 = vxor.u32 %v676, 2147483648
        %v681 = vmul.f32 %v679, 1.442695
        %v682 = vpow.pop %v681
        %v683 = vmul.f32 %v680, 1.442695
        %v684 = vpow.pop %v683
        %v685 = vadd.f32 %v682, 1.0
        %v686 = vadd.f32 %v684, 1.0
        %v687 = vrcp.pop %v685
        %v688 = vmul.f32 1.0, %v687
        %v689 = vrcp.pop %v686
        %v690 = vmul.f32 1.0, %v689
        %s691 = scalar_lea.vmem %s206, 64 [#allocation5]
        %692 = vst.msk [vmem:[%s691] sm:$0xff] %vm319, %v688
        %693 = vst.msk [vmem:[%s691 + $0x8] sm:$0xff] %vm319, %v690
        %s694 = scalar_lea.vmem %s184, 80 [#allocation2]
        %v695 = vld [vmem:[%s694] sm:$0xff]
        %v696 = vld [vmem:[%s694 + $0x8] sm:$0xff]
        %697 = vmatprep.subr.mxu0 0.0
        %698 = vmatpush1.msra.mxu0 %v695
        %699 = vmatprep.subr.mxu0 0.0
        %700 = vmatpush1.msra.mxu0 %v696
        %701 = vmatprep.subr.mxu0 0.0
        %702 = vmatpush1.msra.mxu0 0.0
        %703 = vmatprep.subr.mxu0 0.0
        %704 = vmatpush1.msra.mxu0 0.0
        %705 = vmatprep.subr.mxu0 0.0
        %706 = vmatpush1.msra.mxu0 0.0
        %707 = vmatprep.subr.mxu0 0.0
        %708 = vmatpush1.msra.mxu0 0.0
        %709 = vmatprep.subr.mxu0 0.0
        %710 = vmatpush1.msra.mxu0 0.0
        %711 = vmatprep.subr.mxu0 0.0
        %712 = vmatpush1.msra.mxu0 0.0
        %713 = vmatprep.subr.mxu0 0.0
        %714 = vmatpush1.msra.mxu0 0.0
        %715 = vmatprep.subr.mxu0 0.0
        %716 = vmatpush1.msra.mxu0 0.0
        %717 = vmatprep.subr.mxu0 0.0
        %718 = vmatpush1.msra.mxu0 0.0
        %719 = vmatprep.subr.mxu0 0.0
        %720 = vmatpush1.msra.mxu0 0.0
        %721 = vmatprep.subr.mxu0 0.0
        %722 = vmatpush1.msra.mxu0 0.0
        %723 = vmatprep.subr.mxu0 0.0
        %724 = vmatpush1.msra.mxu0 0.0
        %725 = vmatprep.subr.mxu0 0.0
        %726 = vmatpush1.msra.mxu0 0.0
        %727 = vmatprep.subr.mxu0 0.0
        %728 = vmatpush1.msra.mxu0 0.0
        %729 = vmatprep.subr.mxu0 0.0
        %730 = vmatpush1.msra.mxu0 0.0
        %731 = vmatprep.subr.mxu0 0.0
        %732 = vmatpush1.msra.mxu0 0.0
        %733 = vmatprep.subr.mxu0 0.0
        %734 = vmatpush1.msra.mxu0 0.0
        %735 = vmatprep.subr.mxu0 0.0
        %736 = vmatpush1.msra.mxu0 0.0
        %737 = vmatprep.subr.mxu0 0.0
        %738 = vmatpush1.msra.mxu0 0.0
        %739 = vmatprep.subr.mxu0 0.0
        %740 = vmatpush1.msra.mxu0 0.0
        %741 = vmatprep.subr.mxu0 0.0
        %742 = vmatpush1.msra.mxu0 0.0
        %743 = vmatprep.subr.mxu0 0.0
        %744 = vmatpush1.msra.mxu0 0.0
        %745 = vmatprep.subr.mxu0 0.0
        %746 = vmatpush1.msra.mxu0 0.0
        %747 = vmatprep.subr.mxu0 0.0
        %748 = vmatpush1.msra.mxu0 0.0
        %749 = vmatprep.subr.mxu0 0.0
        %750 = vmatpush1.msra.mxu0 0.0
        %751 = vmatprep.subr.mxu0 0.0
        %752 = vmatpush1.msra.mxu0 0.0
        %753 = vmatprep.subr.mxu0 0.0
        %754 = vmatpush1.msra.mxu0 0.0
        %755 = vmatprep.subr.mxu0 0.0
        %756 = vmatpush1.msra.mxu0 0.0
        %757 = vmatprep.subr.mxu0 0.0
        %758 = vmatpush1.msra.mxu0 0.0
        %759 = vmatprep.subr.mxu0 0.0
        %760 = vmatpush1.msra.mxu0 0.0
        %761 = vmatprep.mubr.f32.mxu0 0.0
        %762 = vmatmul.mubr.f32.gmra.mrb[0].mxu0 %v227
        %v763 = vpop.f32.mrb[0].mxu0
        %v764 = vadd.f32 %v218, %v763
        %v765 = vpop.f32.mrb[0].mxu0
        %766 = vmatprep.mubr.f32.mxu0 0.0
        %767 = vmatmul.mubr.f32.gmra.mrb[0].mxu0 %v230
        %v768 = vpop.f32.mrb[0].mxu0
        %v769 = vadd.f32 %v223, %v768
        %v770 = vpop.f32.mrb[0].mxu0
        %771 = vdwg.mxu0
        %v772 = vxor.u32 %v764, 2147483648
        %v773 = vxor.u32 %v769, 2147483648
        %v774 = vmul.f32 %v772, 1.442695
        %v775 = vpow.pop %v774
        %v776 = vmul.f32 %v773, 1.442695
        %v777 = vpow.pop %v776
        %v778 = vadd.f32 %v775, 1.0
        %v779 = vadd.f32 %v777, 1.0
        %v780 = vrcp.pop %v778
        %v781 = vmul.f32 1.0, %v780
        %v782 = vrcp.pop %v779
        %v783 = vmul.f32 1.0, %v782
        %s784 = scalar_lea.vmem %s206, 80 [#allocation5]
        %785 = vst.msk [vmem:[%s784] sm:$0xff] %vm319, %v781
        %786 = vst.msk [vmem:[%s784 + $0x8] sm:$0xff] %vm319, %v783
        %s787 = scalar_lea.vmem %s184, 96 [#allocation2]
        %v788 = vld [vmem:[%s787] sm:$0xff]
        %v789 = vld [vmem:[%s787 + $0x8] sm:$0xff]
        %790 = vmatprep.subr.mxu0 0.0
        %791 = vmatpush1.msra.mxu0 %v788
        %792 = vmatprep.subr.mxu0 0.0
        %793 = vmatpush1.msra.mxu0 %v789
        %794 = vmatprep.subr.mxu0 0.0
        %795 = vmatpush1.msra.mxu0 0.0
        %796 = vmatprep.subr.mxu0 0.0
        %797 = vmatpush1.msra.mxu0 0.0
        %798 = vmatprep.subr.mxu0 0.0
        %799 = vmatpush1.msra.mxu0 0.0
        %800 = vmatprep.subr.mxu0 0.0
        %801 = vmatpush1.msra.mxu0 0.0
        %802 = vmatprep.subr.mxu0 0.0
        %803 = vmatpush1.msra.mxu0 0.0
        %804 = vmatprep.subr.mxu0 0.0
        %805 = vmatpush1.msra.mxu0 0.0
        %806 = vmatprep.subr.mxu0 0.0
        %807 = vmatpush1.msra.mxu0 0.0
        %808 = vmatprep.subr.mxu0 0.0
        %809 = vmatpush1.msra.mxu0 0.0
        %810 = vmatprep.subr.mxu0 0.0
        %811 = vmatpush1.msra.mxu0 0.0
        %812 = vmatprep.subr.mxu0 0.0
        %813 = vmatpush1.msra.mxu0 0.0
        %814 = vmatprep.subr.mxu0 0.0
        %815 = vmatpush1.msra.mxu0 0.0
        %816 = vmatprep.subr.mxu0 0.0
        %817 = vmatpush1.msra.mxu0 0.0
        %818 = vmatprep.subr.mxu0 0.0
        %819 = vmatpush1.msra.mxu0 0.0
        %820 = vmatprep.subr.mxu0 0.0
        %821 = vmatpush1.msra.mxu0 0.0
        %822 = vmatprep.subr.mxu0 0.0
        %823 = vmatpush1.msra.mxu0 0.0
        %824 = vmatprep.subr.mxu0 0.0
        %825 = vmatpush1.msra.mxu0 0.0
        %826 = vmatprep.subr.mxu0 0.0
        %827 = vmatpush1.msra.mxu0 0.0
        %828 = vmatprep.subr.mxu0 0.0
        %829 = vmatpush1.msra.mxu0 0.0
        %830 = vmatprep.subr.mxu0 0.0
        %831 = vmatpush1.msra.mxu0 0.0
        %832 = vmatprep.subr.mxu0 0.0
        %833 = vmatpush1.msra.mxu0 0.0
        %834 = vmatprep.subr.mxu0 0.0
        %835 = vmatpush1.msra.mxu0 0.0
        %836 = vmatprep.subr.mxu0 0.0
        %837 = vmatpush1.msra.mxu0 0.0
        %838 = vmatprep.subr.mxu0 0.0
        %839 = vmatpush1.msra.mxu0 0.0
        %840 = vmatprep.subr.mxu0 0.0
        %841 = vmatpush1.msra.mxu0 0.0
        %842 = vmatprep.subr.mxu0 0.0
        %843 = vmatpush1.msra.mxu0 0.0
        %844 = vmatprep.subr.mxu0 0.0
        %845 = vmatpush1.msra.mxu0 0.0
        %846 = vmatprep.subr.mxu0 0.0
        %847 = vmatpush1.msra.mxu0 0.0
        %848 = vmatprep.subr.mxu0 0.0
        %849 = vmatpush1.msra.mxu0 0.0
        %850 = vmatprep.subr.mxu0 0.0
        %851 = vmatpush1.msra.mxu0 0.0
        %852 = vmatprep.subr.mxu0 0.0
        %853 = vmatpush1.msra.mxu0 0.0
        %854 = vmatprep.mubr.f32.mxu0 0.0
        %855 = vmatmul.mubr.f32.gmra.mrb[0].mxu0 %v227
        %v856 = vpop.f32.mrb[0].mxu0
        %v857 = vadd.f32 %v218, %v856
        %v858 = vpop.f32.mrb[0].mxu0
        %859 = vmatprep.mubr.f32.mxu0 0.0
        %860 = vmatmul.mubr.f32.gmra.mrb[0].mxu0 %v230
        %v861 = vpop.f32.mrb[0].mxu0
        %v862 = vadd.f32 %v223, %v861
        %v863 = vpop.f32.mrb[0].mxu0
        %864 = vdwg.mxu0
        %v865 = vxor.u32 %v857, 2147483648
        %v866 = vxor.u32 %v862, 2147483648
        %v867 = vmul.f32 %v865, 1.442695
        %v868 = vpow.pop %v867
        %v869 = vmul.f32 %v866, 1.442695
        %v870 = vpow.pop %v869
        %v871 = vadd.f32 %v868, 1.0
        %v872 = vadd.f32 %v870, 1.0
        %v873 = vrcp.pop %v871
        %v874 = vmul.f32 1.0, %v873
        %v875 = vrcp.pop %v872
        %v876 = vmul.f32 1.0, %v875
        %s877 = scalar_lea.vmem %s206, 96 [#allocation5]
        %878 = vst.msk [vmem:[%s877] sm:$0xff] %vm319, %v874
        %879 = vst.msk [vmem:[%s877 + $0x8] sm:$0xff] %vm319, %v876
        %s880 = scalar_lea.vmem %s184, 112 [#allocation2]
        %v881 = vld [vmem:[%s880] sm:$0xff]
        %v882 = vld [vmem:[%s880 + $0x8] sm:$0xff]
        %883 = vmatprep.subr.mxu0 0.0
        %884 = vmatpush1.msra.mxu0 %v881
        %885 = vmatprep.subr.mxu0 0.0
        %886 = vmatpush1.msra.mxu0 %v882
        %887 = vmatprep.subr.mxu0 0.0
        %888 = vmatpush1.msra.mxu0 0.0
        %889 = vmatprep.subr.mxu0 0.0
        %890 = vmatpush1.msra.mxu0 0.0
        %891 = vmatprep.subr.mxu0 0.0
        %892 = vmatpush1.msra.mxu0 0.0
        %893 = vmatprep.subr.mxu0 0.0
        %894 = vmatpush1.msra.mxu0 0.0
        %895 = vmatprep.subr.mxu0 0.0
        %896 = vmatpush1.msra.mxu0 0.0
        %897 = vmatprep.subr.mxu0 0.0
        %898 = vmatpush1.msra.mxu0 0.0
        %899 = vmatprep.subr.mxu0 0.0
        %900 = vmatpush1.msra.mxu0 0.0
        %901 = vmatprep.subr.mxu0 0.0
        %902 = vmatpush1.msra.mxu0 0.0
        %903 = vmatprep.subr.mxu0 0.0
        %904 = vmatpush1.msra.mxu0 0.0
        %905 = vmatprep.subr.mxu0 0.0
        %906 = vmatpush1.msra.mxu0 0.0
        %907 = vmatprep.subr.mxu0 0.0
        %908 = vmatpush1.msra.mxu0 0.0
        %909 = vmatprep.subr.mxu0 0.0
        %910 = vmatpush1.msra.mxu0 0.0
        %911 = vmatprep.subr.mxu0 0.0
        %912 = vmatpush1.msra.mxu0 0.0
        %913 = vmatprep.subr.mxu0 0.0
        %914 = vmatpush1.msra.mxu0 0.0
        %915 = vmatprep.subr.mxu0 0.0
        %916 = vmatpush1.msra.mxu0 0.0
        %917 = vmatprep.subr.mxu0 0.0
        %918 = vmatpush1.msra.mxu0 0.0
        %919 = vmatprep.subr.mxu0 0.0
        %920 = vmatpush1.msra.mxu0 0.0
        %921 = vmatprep.subr.mxu0 0.0
        %922 = vmatpush1.msra.mxu0 0.0
        %923 = vmatprep.subr.mxu0 0.0
        %924 = vmatpush1.msra.mxu0 0.0
        %925 = vmatprep.subr.mxu0 0.0
        %926 = vmatpush1.msra.mxu0 0.0
        %927 = vmatprep.subr.mxu0 0.0
        %928 = vmatpush1.msra.mxu0 0.0
        %929 = vmatprep.subr.mxu0 0.0
        %930 = vmatpush1.msra.mxu0 0.0
        %931 = vmatprep.subr.mxu0 0.0
        %932 = vmatpush1.msra.mxu0 0.0
        %933 = vmatprep.subr.mxu0 0.0
        %934 = vmatpush1.msra.mxu0 0.0
        %935 = vmatprep.subr.mxu0 0.0
        %936 = vmatpush1.msra.mxu0 0.0
        %937 = vmatprep.subr.mxu0 0.0
        %938 = vmatpush1.msra.mxu0 0.0
        %939 = vmatprep.subr.mxu0 0.0
        %940 = vmatpush1.msra.mxu0 0.0
        %941 = vmatprep.subr.mxu0 0.0
        %942 = vmatpush1.msra.mxu0 0.0
        %943 = vmatprep.subr.mxu0 0.0
        %944 = vmatpush1.msra.mxu0 0.0
        %945 = vmatprep.subr.mxu0 0.0
        %946 = vmatpush1.msra.mxu0 0.0
        %947 = vmatprep.mubr.f32.mxu0 0.0
        %948 = vmatmul.mubr.f32.gmra.mrb[0].mxu0 %v227
        %v949 = vpop.f32.mrb[0].mxu0
        %v950 = vadd.f32 %v218, %v949
        %v951 = vpop.f32.mrb[0].mxu0
        %952 = vmatprep.mubr.f32.mxu0 0.0
        %953 = vmatmul.mubr.f32.gmra.mrb[0].mxu0 %v230
        %v954 = vpop.f32.mrb[0].mxu0
        %v955 = vadd.f32 %v223, %v954
        %v956 = vpop.f32.mrb[0].mxu0
        %957 = vdwg.mxu0
        %v958 = vxor.u32 %v950, 2147483648
        %v959 = vxor.u32 %v955, 2147483648
        %v960 = vmul.f32 %v958, 1.442695
        %v961 = vpow.pop %v960
        %v962 = vmul.f32 %v959, 1.442695
        %v963 = vpow.pop %v962
        %v964 = vadd.f32 %v961, 1.0
        %v965 = vadd.f32 %v963, 1.0
        %v966 = vrcp.pop %v964
        %v967 = vmul.f32 1.0, %v966
        %v968 = vrcp.pop %v965
        %v969 = vmul.f32 1.0, %v968
        %s970 = scalar_lea.vmem %s206, 112 [#allocation5]
        %971 = vst.msk [vmem:[%s970] sm:$0xff] %vm319, %v967
        %972 = vst.msk [vmem:[%s970 + $0x8] sm:$0xff] %vm319, %v969
        %s973 = sand.u32 %s112, 1
        %s974 = scalar_lea.sflag [#allocation4], %s973
        %s975 = sand.u32 %s112, 1
        %s976 = smul.addr %s975, 128
        %s977 = scalar_lea.vmem [#allocation5], %s976
        // Predicated region
        $region37: #{tpu_custom_call.1} parent=31 // pred_check
          %p978 = pneg %p122
        $region38: #{tpu_custom_call.1} parent=31 // pred_check_branch
          %980 = sbr.rel (%p978) target = $region40
        $region39: #{tpu_custom_call.1} parent=31 // pred_region
          %s981 = smul.u32 8, %s24
          %s983 = ssub.s32 2048, 2048
          %984 = vsyncadd %s974, %s983
          %s985 = smul.addr %s981, 2
          %s986 = sadd.s32 %s25, %s985
          %s987 = smul.addr %s986, 128
          %s988 = scalar_lea.hbm %s3, %s987
          %s989 = sshll.u32 %s977, 4
          %s990 = int_to_ptr.vmem [resolvable:$true] %s989
          %995 = dma.vmem_to_hbm [thread:$0]  %s990, 2048, %s988, %s974, 128, 128, 8
        $region40: #{tpu_custom_call.1} parent=31 // pred_fallthru
          _
      $region32: #{tpu_custom_call.1} parent=5 // pred_fallthru
        _
      %p996 = scmp.le.s32.totalorder 2, %s15
      // Predicated region
      $region41: #{tpu_custom_call.1} parent=5 // pred_check
        %p997 = pneg %p996
      $region42: #{tpu_custom_call.1} parent=5 // pred_check_branch
        %999 = sbr.rel (%p997) target = $region44
      $region43: #{tpu_custom_call.1} parent=5 // pred_region
        %s1000 = ssub.s32 %s15, 2
        // Predicated region
        $region45: #{tpu_custom_call.1} parent=43 // pred_check
          %p1001 = pneg %p128
        $region46: #{tpu_custom_call.1} parent=43 // pred_check_branch
          %1003 = sbr.rel (%p1001) target = $region48
        $region47: #{tpu_custom_call.1} parent=43 // pred_region
          %s1004 = sand.u32 %s113, 1
          %s1005 = scalar_lea.sflag [#allocation4], %s1004
          %s1006 = sand.u32 %s113, 1
          %s1007 = smul.addr %s1006, 128
          %s1008 = scalar_lea.vmem [#allocation5], %s1007
          %1009 = dma.done %s1005, 2048
        $region48: #{tpu_custom_call.1} parent=43 // pred_fallthru
          _
      $region44: #{tpu_custom_call.1} parent=5 // pred_fallthru
        _
    $region6: #{tpu_custom_call.1} parent=1 // loop_footer
      %s19 = sadd.s32 1, %s15
    $region7: #{tpu_custom_call.1} parent=1 // loop_footer_branch
      %14 = sbr.rel target = $region3
    $region8: #{tpu_custom_call.1} parent=1 // loop_exit
      _
    %1010 = vsyncpa [#allocation3], 1
    %s1011 = scalar_lea.sflag [#allocation3], 1
    %1012 = vsyncpa %s1011, 1
    %1013 = vsyncpa [#allocation4], 1
    %s1014 = scalar_lea.sflag [#allocation4], 1
    %1015 = vsyncpa %s1014, 1

</llo_original>
